<compile_context>
chip_gen: v7x
topology: tpu7x:2x2x1
jax: 0.10.0
libtpu: 0.0.40
codegen_flags: <defaults>
</compile_context>

<pallas_src>
import jax
import jax.numpy as jnp
import numpy as np
from jax.experimental import pallas as pl
from jax.experimental.pallas import tpu as pltpu

MASK_VALUE = -10000000.0
# Global-max clamp for the single-exp softmax: a fully masked tile has
# max == MASK_VALUE; clamping keeps exp() underflowing to 0 there so degenerate
# rows / columns / batch elements produce zero weights instead of NaNs.
_MAX_CLAMP = -30.0
_FIXED_VMEM_BYTES = 2 * 1024 * 1024   # w block, lens, compiler scratch headroom


def _round_up(x, m):
    return ((x + m - 1) // m) * m


def _coattention_kernel(lens_ref, w_ref, p_ref, q_ref, p2q_out_ref, co_out_ref):
    """One grid step = b_tile batch elements.

    lens_ref : SMEM int32 [2 * b_pad]  flat (plen_valid, qlen_valid) per element
    w_ref    : VMEM f32 [4, d]         rows = (w_p, w_q, w_pq, [bias, 0, ...])
    p_ref    : VMEM [b_tile, plen, d]  (input dtype)
    q_ref    : VMEM [b_tile, qlen, d]  (input dtype)
    outputs  : VMEM [b_tile, plen, d]  (input dtype)
    """
    b_tile, plen, _ = p_ref.shape
    qlen = q_ref.shape[1]
    f32 = jnp.float32
    bf16 = jnp.bfloat16

    P = p_ref[...]
    Q = q_ref[...]
    P32 = P.astype(f32)
    Pb = P.astype(bf16)
    Qb = Q.astype(bf16)

    wp = w_ref[0:1, :]          # [1, d]
    wq = w_ref[1:2, :]          # [1, d]
    wpq = w_ref[2:3, :]         # [1, d]
    bias = w_ref[3:4, 0:1]      # [1, 1]

    # --- similarity matrix: score = (P*w_pq + w_q) @ Q^T + (P.w_p + bias) ----
    A = (P32 * wpq + wq).astype(bf16)                                   # [B,plen,d]
    score = jnp.einsum('bpd,bqd->bpq', A, Qb,
                       preferred_element_type=f32)                      # [B,plen,qlen]
    sp = jnp.sum(P32 * wp, axis=-1, keepdims=True) + bias               # [B,plen,1]
    score = score + sp

    # --- rank-1 keep masks rebuilt from prefetched valid lengths -------------
    # (no mask DMA, no dense [plen, qlen] mask materialization)
    b0 = pl.program_id(0) * b_tile
    row_iota = jax.lax.broadcasted_iota(jnp.int32, (plen, 1), 0)
    col_iota = jax.lax.broadcasted_iota(jnp.int32, (1, qlen), 1)
    row_keeps, col_keeps = [], []
    for bb in range(b_tile):                     # b_tile is small and static
        p_len = lens_ref[2 * (b0 + bb)]
        q_len = lens_ref[2 * (b0 + bb) + 1]
        row_keeps.append((row_iota < p_len).astype(f32))
        col_keeps.append((col_iota < q_len).astype(f32))
    row_keep = jnp.stack(row_keeps, axis=0)      # [B, plen, 1]
    col_keep = jnp.stack(col_keeps, axis=0)      # [B, 1, qlen]

    score = jnp.where(col_keep > 0.5, score, MASK_VALUE)
    score = jnp.where(row_keep > 0.5, score, MASK_VALUE)

    # --- single-exp softmax over both orientations ---------------------------
    # One exp of (score - per-element global max), reused for the row (qlen)
    # and column (plen) normalizations.  Masked entries (MASK_VALUE) underflow
    # to exactly 0, so no per-weight masking pass is needed afterwards.
    m_g = jnp.max(jnp.max(score, axis=2, keepdims=True), axis=1, keepdims=True)
    m_g = jnp.maximum(m_g, _MAX_CLAMP)                                  # [B,1,1]
    e = jnp.exp(score - m_g)                                            # [B,plen,qlen]

    s_row = jnp.sum(e, axis=2, keepdims=True)                           # [B,plen,1]
    s_col = jnp.sum(e, axis=1, keepdims=True)                           # [B,1,qlen]
    inv_row = pl.reciprocal(jnp.where(s_row > 0.0, s_row, 1.0), approx=True)
    inv_col = pl.reciprocal(jnp.where(s_col > 0.0, s_col, 1.0), approx=True)

    p2q_w = (e * inv_row).astype(bf16)        # softmax over qlen  [B,plen,qlen]
    q2p_col = (e * inv_col).astype(bf16)      # softmax over plen (== q2p_w^T)

    # --- attention outputs: bf16 MXU operands, f32 accumulation --------------
    p2q_att = jnp.einsum('bpq,bqd->bpd', p2q_w, Qb,
                         preferred_element_type=f32)                    # [B,plen,d]
    q2p_att = jnp.einsum('bpq,bpd->bqd', q2p_col, Pb,
                         preferred_element_type=f32)                    # [B,qlen,d]
    coatt = jnp.einsum('bpq,bqd->bpd', p2q_w, q2p_att.astype(bf16),
                       preferred_element_type=f32)                      # [B,plen,d]

    p2q_out_ref[...] = p2q_att.astype(p2q_out_ref.dtype)
    co_out_ref[...] = coatt.astype(co_out_ref.dtype)


def _vmem_capacity_bytes():
    """Per-generation VMEM capacity; conservative (v7x) fallback."""
    try:
        info = pltpu.get_tpu_info()
        cap = getattr(info, "vmem_capacity_bytes", None)
        if cap:
            return int(cap)
    except Exception:
        pass
    return 64 * 1024 * 1024


def _per_element_vmem_bytes(plen, qlen, d, in_bytes, out_bytes):
    """Rough per-batch-element VMEM footprint (blocks + live temporaries)."""
    # double-buffered P/Q input blocks + two output blocks
    blocks = 2 * ((plen + qlen) * d * in_bytes + 2 * plen * d * out_bytes)
    # dense [plen, qlen] temporaries: score, e, p2q_w, q2p_col + bf16 copies
    dense = plen * qlen * (4 * 4 + 2 * 2)
    # [*, d] temporaries: f32/bf16 staging of P, Q, A, q2p_att, outputs
    vecs = plen * d * (3 * 4 + 2 * 2) + qlen * d * (2 * 4 + 2 * 2)
    return blocks + dense + vecs


def _pick_b_tile(b, per_elem_bytes, budget_bytes):
    """Largest divisor of b that fits the VMEM budget; prefer >= 2 grid steps
    (DMA pipelining overlap, and v7x dual-TensorCore sharding of the parallel
    grid axis) unless that would more than halve the tile."""
    divisors = [c for c in range(b, 0, -1) if b % c == 0]
    fitting = [c for c in divisors
               if _FIXED_VMEM_BYTES + c * per_elem_bytes <= budget_bytes]
    if not fitting:
        return 1
    best = fitting[0]
    multi = [c for c in fitting if b // c >= 2]
    if multi and 2 * multi[0] >= best:
        return multi[0]
    return best


def coattention_forward(passage, question, weight, bias,
                        passage_mask=None, question_mask=None, b_tile=None):
    """passage [b,plen,d], question [b,qlen,d]; weight [1,3d], bias [1] (the
    nn.Linear(3*d, 1) parameters).  Masks: 1 = pad, 0 = keep (suffix padding).
    Returns (p2q_attention [b,plen,d], coattention [b,plen,d]) in the input dtype."""
    b, plen, d = passage.shape
    qlen = question.shape[1]
    if question.dtype != passage.dtype:
        question = question.astype(passage.dtype)
    io_dtype = passage.dtype
    in_bytes = jnp.dtype(io_dtype).itemsize
    out_bytes = in_bytes

    # Valid lengths (the [b,plen]/[b,qlen] masks themselves are never DMA'd).
    # NOTE: assumes padding-style (suffix) masks, as documented in the module.
    if passage_mask is None or question_mask is None:
        p_lens = jnp.full((b,), plen, jnp.int32)
        q_lens = jnp.full((b,), qlen, jnp.int32)
    else:
        p_lens = (plen - jnp.sum(passage_mask.astype(jnp.int32), axis=1)).astype(jnp.int32)
        q_lens = (qlen - jnp.sum(question_mask.astype(jnp.int32), axis=1)).astype(jnp.int32)
    lens = jnp.stack([p_lens, q_lens], axis=1).reshape(-1)               # [2b]

    # Single small constant operand: rows (w_p, w_q, w_pq), bias at [3, 0].
    w = jnp.zeros((4, d), jnp.float32)
    w = w.at[0:3, :].set(weight.astype(jnp.float32).reshape(3, d))
    w = w.at[3, 0].set(bias.astype(jnp.float32).reshape(-1)[0])

    # VMEM-aware batch tiling (per-generation budget via get_tpu_info).
    vmem_cap = _vmem_capacity_bytes()
    per_elem = _per_element_vmem_bytes(plen, qlen, d, in_bytes, out_bytes)
    bt = b_tile if b_tile is not None else _pick_b_tile(b, per_elem, int(0.75 * vmem_cap))
    bt = max(1, min(bt, b))

    # No padded copies of P/Q: blocks span the full (plen, d)/(qlen, d) extents
    # (last-two-dims == full array dims bypasses the (8,128) rule).  Only the
    # batch dim is padded, and only if a user-supplied b_tile forces it;
    # padded elements get length 0 -> zero outputs, sliced off below.
    b_pad = _round_up(b, bt)
    if b_pad != b:
        bpad = b_pad - b
        P_in = jnp.pad(passage, ((0, bpad), (0, 0), (0, 0)))
        Q_in = jnp.pad(question, ((0, bpad), (0, 0), (0, 0)))
        lens = jnp.pad(lens, (0, 2 * bpad))
    else:
        P_in, Q_in = passage, question

    vmem_needed = _FIXED_VMEM_BYTES + bt * per_elem
    vmem_limit = int(min(int(0.9 * vmem_cap), max(16 * 1024 * 1024, vmem_needed)))

    grid = (b_pad // bt,)
    grid_spec = pltpu.PrefetchScalarGridSpec(
        num_scalar_prefetch=1,
        grid=grid,
        in_specs=[
            pl.BlockSpec((4, d), lambda i, _l: (0, 0)),
            pl.BlockSpec((bt, plen, d), lambda i, _l: (i, 0, 0)),
            pl.BlockSpec((bt, qlen, d), lambda i, _l: (i, 0, 0)),
        ],
        out_specs=[
            pl.BlockSpec((bt, plen, d), lambda i, _l: (i, 0, 0)),
            pl.BlockSpec((bt, plen, d), lambda i, _l: (i, 0, 0)),
        ],
    )

    out_shapes = (jax.ShapeDtypeStruct((b_pad, plen, d), io_dtype),
                  jax.ShapeDtypeStruct((b_pad, plen, d), io_dtype))

    cost = pl.CostEstimate(
        flops=int(8 * b_pad * plen * qlen * d),
        transcendentals=int(b_pad * plen * qlen),
        bytes_accessed=int((P_in.size + Q_in.size) * in_bytes + w.size * 4
                           + lens.size * 4 + 2 * b_pad * plen * d * out_bytes))

    p2q_att, coatt = pl.pallas_call(
        _coattention_kernel,
        out_shape=out_shapes,
        grid_spec=grid_spec,
        compiler_params=pltpu.CompilerParams(
            dimension_semantics=("parallel",),
            vmem_limit_bytes=vmem_limit),
        cost_estimate=cost,
    )(lens, w, P_in, Q_in)

    if b_pad != b:
        p2q_att, coatt = p2q_att[:b], coatt[:b]
    return p2q_att, coatt


def _reference_forward(passage, question, weight, bias, pmask, qmask):
    d = passage.shape[-1]
    wp, wq, wpq = weight[0, :d], weight[0, d:2 * d], weight[0, 2 * d:]
    score = (jnp.einsum('bpd,d->bp', passage, wp)[:, :, None]
             + jnp.einsum('bqd,d->bq', question, wq)[:, None, :]
             + jnp.einsum('bpd,bqd->bpq', passage * wpq, question)
             + bias[0])
    keep = (1.0 - pmask)[:, :, None] * (1.0 - qmask)[:, None, :]
    mask = 1.0 - keep
    score = score * keep + mask * MASK_VALUE
    p2q_w = jax.nn.softmax(score, axis=2) * keep
    q2p_w = jax.nn.softmax(jnp.swapaxes(score, 1, 2), axis=2) * jnp.swapaxes(keep, 1, 2)
    p2q_att = jnp.einsum('bpq,bqd->bpd', p2q_w, question)
    q2p_att = jnp.einsum('bqp,bpd->bqd', q2p_w, passage)
    coatt = jnp.einsum('bpq,bqd->bpd', p2q_w, q2p_att)
    return p2q_att, coatt


if __name__ == "__main__":
    b, plen, qlen, d = 4, 16, 8, 32

    key = jax.random.PRNGKey(0)
    k_p, k_q, k_w, k_b = jax.random.split(key, 4)

    passage = jax.random.normal(k_p, (b, plen, d), dtype=jnp.float32)
    question = jax.random.normal(k_q, (b, qlen, d), dtype=jnp.float32)

    # nn.Linear(3*d, 1): weight [1, 3d], bias [1] — deterministic synthetic init
    weight = jax.random.normal(k_w, (1, 3 * d), dtype=jnp.float32) * 0.1
    bias = jax.random.normal(k_b, (1,), dtype=jnp.float32) * 0.1

    # suffix pad masks: 1 = pad, 0 = keep
    p_valid = jnp.array([13, 10, 16, 7], dtype=jnp.int32)
    q_valid = jnp.array([6, 8, 5, 8], dtype=jnp.int32)
    passage_mask = (jnp.arange(plen)[None, :] >= p_valid[:, None]).astype(jnp.float32)
    question_mask = (jnp.arange(qlen)[None, :] >= q_valid[:, None]).astype(jnp.float32)

    p2q_att, coatt = coattention_forward(passage, question, weight, bias,
                                         passage_mask, question_mask)
    jax.block_until_ready((p2q_att, coatt))

    p2q_ref, co_ref = _reference_forward(passage, question, weight, bias,
                                         passage_mask, question_mask)
    # tolerance covers bf16 MXU operands (~2^-9 relative), the shared global-max
    # softmax, and the EUP approximate-reciprocal normalization
    np.testing.assert_allclose(np.asarray(p2q_att), np.asarray(p2q_ref),
                               rtol=3e-2, atol=3e-2)
    np.testing.assert_allclose(np.asarray(coatt), np.asarray(co_ref),
                               rtol=3e-2, atol=3e-2)

    print("KERNEL_OK")
</pallas_src>

<mosaic_0001>
module attributes {stable_mosaic.version = 11 : i64} {
  func.func @_coattention_kernel(%arg0: i32, %arg1: memref<8xi32, #tpu.memory_space<smem>>, %arg2: memref<4x32xf32, #tpu.memory_space<vmem>>, %arg3: memref<2x16x32xf32, #tpu.memory_space<vmem>>, %arg4: memref<2x8x32xf32, #tpu.memory_space<vmem>>, %arg5: memref<2x16x32xf32, #tpu.memory_space<vmem>>, %arg6: memref<2x16x32xf32, #tpu.memory_space<vmem>>) attributes {dimension_semantics = [#tpu.dimension_semantics<parallel>], iteration_bounds = array<i64: 2>, scalar_prefetch = 1 : i64, scratch_operands = 0 : i64, tpu.core_type = #tpu.core_type<tc>, window_params = [{pipeline_mode = #tpu.pipeline_mode<synchronous>, transform_indices = @transform_0, window_bounds = array<i64: 4, 32>}, {transform_indices = @transform_1, window_bounds = array<i64: 2, 16, 32>}, {transform_indices = @transform_2, window_bounds = array<i64: 2, 8, 32>}, {transform_indices = @transform_3, window_bounds = array<i64: 2, 16, 32>}, {transform_indices = @transform_4, window_bounds = array<i64: 2, 16, 32>}]} {
    %c0 = arith.constant 0 : index
    %c0_0 = arith.constant 0 : index
    %c0_1 = arith.constant 0 : index
    %0 = vector.load %arg3[%c0, %c0_0, %c0_1] : memref<2x16x32xf32, #tpu.memory_space<vmem>>, vector<2x16x32xf32>
    %c0_2 = arith.constant 0 : index
    %c0_3 = arith.constant 0 : index
    %c0_4 = arith.constant 0 : index
    %1 = vector.load %arg4[%c0_2, %c0_3, %c0_4] : memref<2x8x32xf32, #tpu.memory_space<vmem>>, vector<2x8x32xf32>
    %2 = arith.truncf %0 : vector<2x16x32xf32> to vector<2x16x32xbf16>
    %3 = arith.truncf %1 : vector<2x8x32xf32> to vector<2x8x32xbf16>
    %c0_5 = arith.constant 0 : index
    %c0_6 = arith.constant 0 : index
    %4 = vector.load %arg2[%c0_5, %c0_6] : memref<4x32xf32, #tpu.memory_space<vmem>>, vector<1x32xf32>
    %c1 = arith.constant 1 : index
    %c0_7 = arith.constant 0 : index
    %5 = vector.load %arg2[%c1, %c0_7] : memref<4x32xf32, #tpu.memory_space<vmem>>, vector<1x32xf32>
    %c2 = arith.constant 2 : index
    %c0_8 = arith.constant 0 : index
    %6 = vector.load %arg2[%c2, %c0_8] : memref<4x32xf32, #tpu.memory_space<vmem>>, vector<1x32xf32>
    %c3 = arith.constant 3 : index
    %c0_9 = arith.constant 0 : index
    %7 = vector.load %arg2[%c3, %c0_9] : memref<4x32xf32, #tpu.memory_space<vmem>>, vector<1x1xf32>
    %8 = vector.shape_cast %6 : vector<1x32xf32> to vector<1x1x32xf32>
    %9 = vector.broadcast %8 : vector<1x1x32xf32> to vector<2x16x32xf32>
    %10 = arith.mulf %0, %9 : vector<2x16x32xf32>
    %11 = vector.shape_cast %5 : vector<1x32xf32> to vector<1x1x32xf32>
    %12 = vector.broadcast %11 : vector<1x1x32xf32> to vector<2x16x32xf32>
    %13 = arith.addf %10, %12 : vector<2x16x32xf32>
    %14 = arith.truncf %13 : vector<2x16x32xf32> to vector<2x16x32xbf16>
    "tpu.trace_start"() <{level = 10 : i32, message = "bpd,bqd->bpq"}> : () -> ()
    %cst = arith.constant dense<0.000000e+00> : vector<2x16x8xf32>
    %15 = tpu.matmul %14, %3, %cst {dimension_numbers = #tpu.dot_dimension_numbers<[2], [2], [1], [1], [0, 0, 0, 1, 1, 1], [0], [0]>} : vector<2x16x32xbf16>, vector<2x8x32xbf16>, vector<2x16x8xf32> -> vector<2x16x8xf32>
    "tpu.trace_stop"() : () -> ()
    %16 = vector.shape_cast %4 : vector<1x32xf32> to vector<1x1x32xf32>
    %17 = vector.broadcast %16 : vector<1x1x32xf32> to vector<2x16x32xf32>
    %18 = arith.mulf %0, %17 : vector<2x16x32xf32>
    %cst_10 = arith.constant dense<0.000000e+00> : vector<2x16xf32>
    %19 = vector.multi_reduction <add>, %18, %cst_10 [2] : vector<2x16x32xf32> to vector<2x16xf32>
    %20 = vector.shape_cast %19 : vector<2x16xf32> to vector<2x16x1xf32>
    %21 = vector.shape_cast %7 : vector<1x1xf32> to vector<1x1x1xf32>
    %22 = vector.broadcast %21 : vector<1x1x1xf32> to vector<2x16x1xf32>
    %23 = arith.addf %20, %22 : vector<2x16x1xf32>
    %24 = vector.broadcast %23 : vector<2x16x1xf32> to vector<2x16x8xf32>
    %25 = arith.addf %15, %24 : vector<2x16x8xf32>
    %c2_i32 = arith.constant 2 : i32
    %26 = arith.muli %arg0, %c2_i32 : i32
    %27 = tpu.iota {dimensions = array<i32: 0>} : vector<16x1xi32>
    %28 = tpu.iota {dimensions = array<i32: 1>} : vector<1x8xi32>
    %c0_i32 = arith.constant 0 : i32
    %29 = arith.addi %26, %c0_i32 : i32
    %c2_i32_11 = arith.constant 2 : i32
    %30 = arith.muli %c2_i32_11, %29 : i32
    %31 = arith.index_cast %30 : i32 to index
    %32 = memref.load %arg1[%31] : memref<8xi32, #tpu.memory_space<smem>>
    %c0_i32_12 = arith.constant 0 : i32
    %33 = arith.addi %26, %c0_i32_12 : i32
    %c2_i32_13 = arith.constant 2 : i32
    %34 = arith.muli %c2_i32_13, %33 : i32
    %c1_i32 = arith.constant 1 : i32
    %35 = arith.addi %34, %c1_i32 : i32
    %36 = arith.index_cast %35 : i32 to index
    %37 = memref.load %arg1[%36] : memref<8xi32, #tpu.memory_space<smem>>
    %38 = vector.broadcast %32 : i32 to vector<16x1xi32>
    %39 = arith.cmpi slt, %27, %38 : vector<16x1xi32>
    %40 = arith.extui %39 : vector<16x1xi1> to vector<16x1xi32>
    %41 = arith.sitofp %40 : vector<16x1xi32> to vector<16x1xf32>
    %42 = vector.broadcast %37 : i32 to vector<1x8xi32>
    %43 = arith.cmpi slt, %28, %42 : vector<1x8xi32>
    %44 = arith.extui %43 : vector<1x8xi1> to vector<1x8xi32>
    %45 = arith.sitofp %44 : vector<1x8xi32> to vector<1x8xf32>
    %c1_i32_14 = arith.constant 1 : i32
    %46 = arith.addi %26, %c1_i32_14 : i32
    %c2_i32_15 = arith.constant 2 : i32
    %47 = arith.muli %c2_i32_15, %46 : i32
    %48 = arith.index_cast %47 : i32 to index
    %49 = memref.load %arg1[%48] : memref<8xi32, #tpu.memory_space<smem>>
    %c1_i32_16 = arith.constant 1 : i32
    %50 = arith.addi %26, %c1_i32_16 : i32
    %c2_i32_17 = arith.constant 2 : i32
    %51 = arith.muli %c2_i32_17, %50 : i32
    %c1_i32_18 = arith.constant 1 : i32
    %52 = arith.addi %51, %c1_i32_18 : i32
    %53 = arith.index_cast %52 : i32 to index
    %54 = memref.load %arg1[%53] : memref<8xi32, #tpu.memory_space<smem>>
    %55 = vector.broadcast %49 : i32 to vector<16x1xi32>
    %56 = arith.cmpi slt, %27, %55 : vector<16x1xi32>
    %57 = arith.extui %56 : vector<16x1xi1> to vector<16x1xi32>
    %58 = arith.sitofp %57 : vector<16x1xi32> to vector<16x1xf32>
    %59 = vector.broadcast %54 : i32 to vector<1x8xi32>
    %60 = arith.cmpi slt, %28, %59 : vector<1x8xi32>
    %61 = arith.extui %60 : vector<1x8xi1> to vector<1x8xi32>
    %62 = arith.sitofp %61 : vector<1x8xi32> to vector<1x8xf32>
    %63 = vector.shape_cast %41 : vector<16x1xf32> to vector<1x16x1xf32>
    %64 = vector.shape_cast %58 : vector<16x1xf32> to vector<1x16x1xf32>
    %65 = tpu.concatenate %63, %64 in 0 : vector<1x16x1xf32>, vector<1x16x1xf32> -> vector<2x16x1xf32>
    %66 = vector.shape_cast %45 : vector<1x8xf32> to vector<1x1x8xf32>
    %67 = vector.shape_cast %62 : vector<1x8xf32> to vector<1x1x8xf32>
    %68 = tpu.concatenate %66, %67 in 0 : vector<1x1x8xf32>, vector<1x1x8xf32> -> vector<2x1x8xf32>
    %cst_19 = arith.constant 5.000000e-01 : f32
    %69 = vector.broadcast %cst_19 : f32 to vector<2x1x8xf32>
    %70 = arith.cmpf ogt, %68, %69 : vector<2x1x8xf32>
    %cst_20 = arith.constant -1.000000e+07 : f32
    %71 = vector.shape_cast %70 : vector<2x1x8xi1> to vector<2x1x8xi1>
    %72 = vector.broadcast %71 : vector<2x1x8xi1> to vector<2x16x8xi1>
    %73 = vector.broadcast %cst_20 : f32 to vector<2x16x8xf32>
    %74 = arith.select %72, %25, %73 : vector<2x16x8xi1>, vector<2x16x8xf32>
    %cst_21 = arith.constant 5.000000e-01 : f32
    %75 = vector.broadcast %cst_21 : f32 to vector<2x16x1xf32>
    %76 = arith.cmpf ogt, %65, %75 : vector<2x16x1xf32>
    %cst_22 = arith.constant -1.000000e+07 : f32
    %77 = vector.shape_cast %76 : vector<2x16x1xi1> to vector<2x16x1xi1>
    %78 = vector.broadcast %77 : vector<2x16x1xi1> to vector<2x16x8xi1>
    %79 = vector.broadcast %cst_22 : f32 to vector<2x16x8xf32>
    %80 = arith.select %78, %74, %79 : vector<2x16x8xi1>, vector<2x16x8xf32>
    %cst_23 = arith.constant dense<0xFF800000> : vector<2x16xf32>
    %81 = vector.multi_reduction <maximumf>, %80, %cst_23 [2] : vector<2x16x8xf32> to vector<2x16xf32>
    %82 = vector.shape_cast %81 : vector<2x16xf32> to vector<2x16x1xf32>
    %cst_24 = arith.constant dense<0xFF800000> : vector<2x1xf32>
    %83 = vector.multi_reduction <maximumf>, %82, %cst_24 [1] : vector<2x16x1xf32> to vector<2x1xf32>
    %84 = vector.shape_cast %83 : vector<2x1xf32> to vector<2x1x1xf32>
    %cst_25 = arith.constant -3.000000e+01 : f32
    %85 = vector.broadcast %cst_25 : f32 to vector<2x1x1xf32>
    %86 = arith.maximumf %84, %85 : vector<2x1x1xf32>
    %87 = vector.broadcast %86 : vector<2x1x1xf32> to vector<2x16x8xf32>
    %88 = arith.subf %80, %87 : vector<2x16x8xf32>
    %89 = math.exp %88 : vector<2x16x8xf32>
    %cst_26 = arith.constant dense<0.000000e+00> : vector<2x16xf32>
    %90 = vector.multi_reduction <add>, %89, %cst_26 [2] : vector<2x16x8xf32> to vector<2x16xf32>
    %91 = vector.shape_cast %90 : vector<2x16xf32> to vector<2x16x1xf32>
    %cst_27 = arith.constant dense<0.000000e+00> : vector<2x8xf32>
    %92 = vector.multi_reduction <add>, %89, %cst_27 [1] : vector<2x16x8xf32> to vector<2x8xf32>
    %93 = vector.shape_cast %92 : vector<2x8xf32> to vector<2x1x8xf32>
    %cst_28 = arith.constant 0.000000e+00 : f32
    %94 = vector.broadcast %cst_28 : f32 to vector<2x16x1xf32>
    %95 = arith.cmpf ogt, %91, %94 : vector<2x16x1xf32>
    %cst_29 = arith.constant 1.000000e+00 : f32
    %96 = vector.broadcast %cst_29 : f32 to vector<2x16x1xf32>
    %97 = arith.select %95, %91, %96 : vector<2x16x1xi1>, vector<2x16x1xf32>
    %98 = tpu.reciprocal %97 {approx = true} : vector<2x16x1xf32> -> vector<2x16x1xf32>
    %cst_30 = arith.constant 0.000000e+00 : f32
    %99 = vector.broadcast %cst_30 : f32 to vector<2x1x8xf32>
    %100 = arith.cmpf ogt, %93, %99 : vector<2x1x8xf32>
    %cst_31 = arith.constant 1.000000e+00 : f32
    %101 = vector.broadcast %cst_31 : f32 to vector<2x1x8xf32>
    %102 = arith.select %100, %93, %101 : vector<2x1x8xi1>, vector<2x1x8xf32>
    %103 = tpu.reciprocal %102 {approx = true} : vector<2x1x8xf32> -> vector<2x1x8xf32>
    %104 = vector.broadcast %98 : vector<2x16x1xf32> to vector<2x16x8xf32>
    %105 = arith.mulf %89, %104 : vector<2x16x8xf32>
    %106 = arith.truncf %105 : vector<2x16x8xf32> to vector<2x16x8xbf16>
    %107 = vector.broadcast %103 : vector<2x1x8xf32> to vector<2x16x8xf32>
    %108 = arith.mulf %89, %107 : vector<2x16x8xf32>
    %109 = arith.truncf %108 : vector<2x16x8xf32> to vector<2x16x8xbf16>
    "tpu.trace_start"() <{level = 10 : i32, message = "bpq,bqd->bpd"}> : () -> ()
    %cst_32 = arith.constant dense<0.000000e+00> : vector<2x16x32xf32>
    %110 = tpu.matmul %106, %3, %cst_32 {dimension_numbers = #tpu.dot_dimension_numbers<[2], [1], [1], [2], [0, 0, 0, 1, 1, 2], [0], [0]>} : vector<2x16x8xbf16>, vector<2x8x32xbf16>, vector<2x16x32xf32> -> vector<2x16x32xf32>
    "tpu.trace_stop"() : () -> ()
    "tpu.trace_start"() <{level = 10 : i32, message = "bpq,bpd->bqd"}> : () -> ()
    %cst_33 = arith.constant dense<0.000000e+00> : vector<2x8x32xf32>
    %111 = tpu.matmul %109, %2, %cst_33 {dimension_numbers = #tpu.dot_dimension_numbers<[1], [1], [2], [2], [0, 0, 0, 2, 1, 2], [0], [0]>} : vector<2x16x8xbf16>, vector<2x16x32xbf16>, vector<2x8x32xf32> -> vector<2x8x32xf32>
    "tpu.trace_stop"() : () -> ()
    %112 = arith.truncf %111 : vector<2x8x32xf32> to vector<2x8x32xbf16>
    "tpu.trace_start"() <{level = 10 : i32, message = "bpq,bqd->bpd"}> : () -> ()
    %cst_34 = arith.constant dense<0.000000e+00> : vector<2x16x32xf32>
    %113 = tpu.matmul %106, %112, %cst_34 {dimension_numbers = #tpu.dot_dimension_numbers<[2], [1], [1], [2], [0, 0, 0, 1, 1, 2], [0], [0]>} : vector<2x16x8xbf16>, vector<2x8x32xbf16>, vector<2x16x32xf32> -> vector<2x16x32xf32>
    "tpu.trace_stop"() : () -> ()
    %c0_35 = arith.constant 0 : index
    %c0_36 = arith.constant 0 : index
    %c0_37 = arith.constant 0 : index
    %114 = vector.load %arg5[%c0_35, %c0_36, %c0_37] : memref<2x16x32xf32, #tpu.memory_space<vmem>>, vector<2x16x32xf32>
    tpu.vector_store %arg5[%c0_35, %c0_36, %c0_37], %110 {strides = array<i32>} : memref<2x16x32xf32, #tpu.memory_space<vmem>>, vector<2x16x32xf32>,
    %c0_38 = arith.constant 0 : index
    %c0_39 = arith.constant 0 : index
    %c0_40 = arith.constant 0 : index
    %115 = vector.load %arg6[%c0_38, %c0_39, %c0_40] : memref<2x16x32xf32, #tpu.memory_space<vmem>>, vector<2x16x32xf32>
    tpu.vector_store %arg6[%c0_38, %c0_39, %c0_40], %113 {strides = array<i32>} : memref<2x16x32xf32, #tpu.memory_space<vmem>>, vector<2x16x32xf32>,
    return
  }
  func.func @transform_0(%arg0: i32, %arg1: memref<8xi32, #tpu.memory_space<smem>>) -> (i32, i32) {
    %c0_i32 = arith.constant 0 : i32
    %c0_i32_0 = arith.constant 0 : i32
    %c0_i32_1 = arith.constant 0 : i32
    return %c0_i32, %c0_i32_0 : i32, i32
  }
  func.func @transform_1(%arg0: i32, %arg1: memref<8xi32, #tpu.memory_space<smem>>) -> (i32, i32, i32) {
    %c0_i32 = arith.constant 0 : i32
    %c0_i32_0 = arith.constant 0 : i32
    %c0_i32_1 = arith.constant 0 : i32
    return %arg0, %c0_i32, %c0_i32_0 : i32, i32, i32
  }
  func.func @transform_2(%arg0: i32, %arg1: memref<8xi32, #tpu.memory_space<smem>>) -> (i32, i32, i32) {
    %c0_i32 = arith.constant 0 : i32
    %c0_i32_0 = arith.constant 0 : i32
    %c0_i32_1 = arith.constant 0 : i32
    return %arg0, %c0_i32, %c0_i32_0 : i32, i32, i32
  }
  func.func @transform_3(%arg0: i32, %arg1: memref<8xi32, #tpu.memory_space<smem>>) -> (i32, i32, i32) {
    %c0_i32 = arith.constant 0 : i32
    %c0_i32_0 = arith.constant 0 : i32
    %c0_i32_1 = arith.constant 0 : i32
    return %arg0, %c0_i32, %c0_i32_0 : i32, i32, i32
  }
  func.func @transform_4(%arg0: i32, %arg1: memref<8xi32, #tpu.memory_space<smem>>) -> (i32, i32, i32) {
    %c0_i32 = arith.constant 0 : i32
    %c0_i32_0 = arith.constant 0 : i32
    %c0_i32_1 = arith.constant 0 : i32
    return %arg0, %c0_i32, %c0_i32_0 : i32, i32, i32
  }
}

</mosaic_0001>

<llo_original>
// kernel: tpu_custom_call.1
$region0: #{tpu_custom_call.1}
  #allocation0 [shape = 'u32[]', space=smem, size = 0x4, offset = 0x4, fixed_abs, tag = 'smem constant byte address 0x4 - core index']
  #allocation1 [shape = 'u32[144,128]{1,0:T(1,128)}', space=vmem, size = 0x12000, scoped, tag = 'internal scratch']
  #allocation2 [shape = 's32[1]{0}', space=sflag, size = 0x4, scoped, tag = 'scoped memory for tpu_custom_call.1']
  #allocation3 [shape = 'u8[512]{0}', space=smem, size = 0x200, scoped, tag = 'prefetched SMEM operand 0']
  %s0 = inlined_call_operand.hbm [shape: s32[8], index: 0, kind: input, shape index: {}]
  %s1 = inlined_call_operand.hbm [shape: f32[4,32], index: 1, kind: input, shape index: {}]
  %s2 = inlined_call_operand.hbm [shape: f32[4,16,32], index: 2, kind: input, shape index: {}]
  %s3 = inlined_call_operand.hbm [shape: f32[4,8,32], index: 3, kind: input, shape index: {}]
  %s4 = inlined_call_operand.hbm [shape: f32[4,16,32], index: 4, kind: output, shape index: {0}]
  %s5 = inlined_call_operand.hbm [shape: f32[4,16,32], index: 5, kind: output, shape index: {1}]
  %6 = xla_tuple %s4, %s5
  %s7 = sld [smem:[#allocation0]]
  $region65: #{tpu_custom_call.1} parent=0
    _
  %s9 = ssub.s32 1, %s7
  %s10 = scalar_select 0, %s9, %s7
  %12 = dma.hbm_to_smem %s0, 16, [#allocation3], [#allocation2]
  %13 = dma.done [#allocation2], 16
  %14 = sfence
  $region1: #{tpu_custom_call.1} parent=0
    #allocation4 [shape = 'u8[2048]{0}', space=vmem, size = 0x800, scoped, tag = 'input window, operand 1, single buffered']
    #allocation5 [shape = 's32[2]{0}', space=sflag, size = 0x8, scoped, tag = 'scoped memory for tpu_custom_call.1']
    #allocation6 [shape = 's32[2]{0}', space=sflag, size = 0x8, scoped, tag = 'scoped memory for tpu_custom_call.1']
    #allocation7 [shape = 'u8[32768]{0}', space=vmem, size = 0x8000, scoped, tag = 'input window, operand 2']
    #allocation8 [shape = 's32[2]{0}', space=sflag, size = 0x8, scoped, tag = 'scoped memory for tpu_custom_call.1']
    #allocation9 [shape = 'u8[16384]{0}', space=vmem, size = 0x4000, scoped, tag = 'input window, operand 3']
    #allocation10 [shape = 'u8[32768]{0}', space=vmem, size = 0x8000, scoped, tag = 'output window, operand 0']
    #allocation11 [shape = 'u8[32768]{0}', space=vmem, size = 0x8000, scoped, tag = 'output window, operand 1']
    #allocation12 [shape = 's32[2]{0}', space=sflag, size = 0x8, scoped, tag = 'scoped memory for tpu_custom_call.1']
    %15 = vsyncpa [#allocation5], 0
    %16 = vsyncpa [#allocation8], 0
    %s17 = scalar_lea.sflag [#allocation8], 1
    %18 = vsyncpa %s17, 0
    %19 = vsyncpa [#allocation6], 0
    %s20 = scalar_lea.sflag [#allocation6], 1
    %21 = vsyncpa %s20, 0
    %22 = vsyncpa [#allocation12], 0
    %s23 = scalar_lea.sflag [#allocation12], 1
    %24 = vsyncpa %s23, 0
    loop: start=0, step=1, limit=4
    $region2: #{tpu_custom_call.1} parent=1 // loop_pre_header
      _
    $region3: #{tpu_custom_call.1} parent=1 // loop_header
      %s26 = sphi 0, %s30
      %p27 = scmp.ge.s32.totalorder %s26, 4
      %s34 = sphi 0, %s34
      %s36 = sphi 0, %s34
      %s37 = sphi 0, %s36
      %s51 = sphi 0, %s37
      %s57 = sphi 0, %s59
      %s60 = sphi 0, %s57
      %s61 = sphi 0, %s60
      %s77 = sphi 0, %s61
      %s83 = sphi 0, %s85
      %s86 = sphi 0, %s83
      %s87 = sphi 0, %s86
      %s103 = sphi 0, %s87
      %s109 = sphi 0, %s111
      %s112 = sphi 0, %s109
      %s113 = sphi 0, %s112
      %s129 = sphi 0, %s113
      %s135 = sphi 0, %s137
      %s138 = sphi 0, %s135
      %s139 = sphi 0, %s138
      %s155 = sphi 0, %s139
    $region4: #{tpu_custom_call.1} parent=1 // loop_header_branch
      %29 = sbr.rel (%p27) target = $region8
    $region5: #{tpu_custom_call.1} parent=1 // loop_body
      %s31 = ssub.s32 %s26, 1
      %s32 = ssub.s32 %s26, 2
      %s33 = sadd.s32 %s26, 1
      %s35 = sadd.s32 %s34, 1
      %p38 = scmp.eq.s32.totalorder %s26, 1
      %p39 = scmp.ne.s32.totalorder %s34, %s36
      %p40 = scmp.eq.s32.totalorder %s26, 0
      %p41 = por %p39, %p40
      %p42 = scmp.ne.s32.totalorder %s34, %s36
      %p43 = scmp.eq.s32.totalorder %s31, 1
      %p44 = por %p42, %p43
      %p45 = scmp.ne.s32.totalorder %s36, %s37
      %p46 = scmp.eq.s32.totalorder %s31, 0
      %p47 = por %p45, %p46
      %p48 = scmp.ne.s32.totalorder %s36, %s37
      %p49 = scmp.eq.s32.totalorder %s32, 1
      %p50 = por %p48, %p49
      %p52 = scmp.ne.s32.totalorder %s37, %s51
      %p53 = scmp.eq.s32.totalorder %s32, 0
      %p54 = por %p52, %p53
      %s55 = ssub.s32 %s26, %s33
      %p56 = scmp.eq.s32.totalorder %s55, 0
      %s58 = sadd.s32 %s57, 1
      %s59 = scalar_select %p56, %s57, %s58
      %p62 = pneg %p56
      %p63 = scmp.eq.s32.totalorder %s26, 1
      %p64 = por %p62, %p63
      %p65 = scmp.ne.s32.totalorder %s57, %s60
      %p66 = scmp.eq.s32.totalorder %s26, 0
      %p67 = por %p65, %p66
      %p68 = scmp.ne.s32.totalorder %s57, %s60
      %p69 = scmp.eq.s32.totalorder %s31, 1
      %p70 = por %p68, %p69
      %p71 = scmp.ne.s32.totalorder %s60, %s61
      %p72 = scmp.eq.s32.totalorder %s31, 0
      %p73 = por %p71, %p72
      %p74 = scmp.ne.s32.totalorder %s60, %s61
      %p75 = scmp.eq.s32.totalorder %s32, 1
      %p76 = por %p74, %p75
      %p78 = scmp.ne.s32.totalorder %s61, %s77
      %p79 = scmp.eq.s32.totalorder %s32, 0
      %p80 = por %p78, %p79
      %s81 = ssub.s32 %s26, %s33
      %p82 = scmp.eq.s32.totalorder %s81, 0
      %s84 = sadd.s32 %s83, 1
      %s85 = scalar_select %p82, %s83, %s84
      %p88 = pneg %p82
      %p89 = scmp.eq.s32.totalorder %s26, 1
      %p90 = por %p88, %p89
      %p91 = scmp.ne.s32.totalorder %s83, %s86
      %p92 = scmp.eq.s32.totalorder %s26, 0
      %p93 = por %p91, %p92
      %p94 = scmp.ne.s32.totalorder %s83, %s86
      %p95 = scmp.eq.s32.totalorder %s31, 1
      %p96 = por %p94, %p95
      %p97 = scmp.ne.s32.totalorder %s86, %s87
      %p98 = scmp.eq.s32.totalorder %s31, 0
      %p99 = por %p97, %p98
      %p100 = scmp.ne.s32.totalorder %s86, %s87
      %p101 = scmp.eq.s32.totalorder %s32, 1
      %p102 = por %p100, %p101
      %p104 = scmp.ne.s32.totalorder %s87, %s103
      %p105 = scmp.eq.s32.totalorder %s32, 0
      %p106 = por %p104, %p105
      %s107 = ssub.s32 %s26, %s33
      %p108 = scmp.eq.s32.totalorder %s107, 0
      %s110 = sadd.s32 %s109, 1
      %s111 = scalar_select %p108, %s109, %s110
      %p114 = pneg %p108
      %p115 = scmp.eq.s32.totalorder %s26, 1
      %p116 = por %p114, %p115
      %p117 = scmp.ne.s32.totalorder %s109, %s112
      %p118 = scmp.eq.s32.totalorder %s26, 0
      %p119 = por %p117, %p118
      %p120 = scmp.ne.s32.totalorder %s109, %s112
      %p121 = scmp.eq.s32.totalorder %s31, 1
      %p122 = por %p120, %p121
      %p123 = scmp.ne.s32.totalorder %s112, %s113
      %p124 = scmp.eq.s32.totalorder %s31, 0
      %p125 = por %p123, %p124
      %p126 = scmp.ne.s32.totalorder %s112, %s113
      %p127 = scmp.eq.s32.totalorder %s32, 1
      %p128 = por %p126, %p127
      %p130 = scmp.ne.s32.totalorder %s113, %s129
      %p131 = scmp.eq.s32.totalorder %s32, 0
      %p132 = por %p130, %p131
      %s133 = ssub.s32 %s26, %s33
      %p134 = scmp.eq.s32.totalorder %s133, 0
      %s136 = sadd.s32 %s135, 1
      %s137 = scalar_select %p134, %s135, %s136
      %p140 = pneg %p134
      %p141 = scmp.eq.s32.totalorder %s26, 1
      %p142 = por %p140, %p141
      %p143 = scmp.ne.s32.totalorder %s135, %s138
      %p144 = scmp.eq.s32.totalorder %s26, 0
      %p145 = por %p143, %p144
      %p146 = scmp.ne.s32.totalorder %s135, %s138
      %p147 = scmp.eq.s32.totalorder %s31, 1
      %p148 = por %p146, %p147
      %p149 = scmp.ne.s32.totalorder %s138, %s139
      %p150 = scmp.eq.s32.totalorder %s31, 0
      %p151 = por %p149, %p150
      %p152 = scmp.ne.s32.totalorder %s138, %s139
      %p153 = scmp.eq.s32.totalorder %s32, 1
      %p154 = por %p152, %p153
      %p156 = scmp.ne.s32.totalorder %s139, %s155
      %p157 = scmp.eq.s32.totalorder %s32, 0
      %p158 = por %p156, %p157
      %p159 = scmp.le.s32.totalorder 1, %s26
      %p160 = scmp.lt.s32.totalorder %s26, 3
      %p161 = pnand %p159, %p160
      %p162 = pneg %p161
      // Predicated region
      $region9: #{tpu_custom_call.1} parent=5 // pred_check
        _
      $region10: #{tpu_custom_call.1} parent=5 // pred_check_branch
        %164 = sbr.rel (%p161) target = $region12
      $region11: #{tpu_custom_call.1} parent=5 // pred_region
        %s165 = ssub.s32 %s26, 1
        // Predicated region
        $region13: #{tpu_custom_call.1} parent=11 // pred_check
          %p166 = pneg %p47
        $region14: #{tpu_custom_call.1} parent=11 // pred_check_branch
          %168 = sbr.rel (%p166) target = $region16
        $region15: #{tpu_custom_call.1} parent=11 // pred_region
          %s170 = ssub.s32 64, 64
          %171 = vsyncadd [#allocation5], %s170
          %s173 = sshll.u32 [#allocation4], 4
          %s174 = int_to_ptr.vmem [resolvable:$true] %s173
          %176 = dma.hbm_to_vmem [thread:$0]  %s1, 64, %s174, [#allocation5]
        $region16: #{tpu_custom_call.1} parent=11 // pred_fallthru
          _
      $region12: #{tpu_custom_call.1} parent=5 // pred_fallthru
        _
      %p177 = scmp.lt.s32.totalorder %s26, 2
      // Predicated region
      $region17: #{tpu_custom_call.1} parent=5 // pred_check
        %p178 = pneg %p177
      $region18: #{tpu_custom_call.1} parent=5 // pred_check_branch
        %180 = sbr.rel (%p178) target = $region20
      $region19: #{tpu_custom_call.1} parent=5 // pred_region
        // Predicated region
        $region21: #{tpu_custom_call.1} parent=19 // pred_check
          %p181 = pneg %p67
        $region22: #{tpu_custom_call.1} parent=19 // pred_check_branch
          %183 = sbr.rel (%p181) target = $region24
        $region23: #{tpu_custom_call.1} parent=19 // pred_region
          %s184 = sand.u32 %s26, 1
          %s185 = scalar_lea.sflag [#allocation8], %s184
          %s186 = sand.u32 %s57, 1
          %s187 = smul.addr %s186, 32
          %s188 = scalar_lea.vmem [#allocation7], %s187
          %s189 = smul.u32 2, %s26
          %s191 = ssub.s32 512, 512
          %192 = vsyncadd %s185, %s191
          %s193 = smul.addr %s189, 2
          %s194 = smul.addr %s193, 128
          %s195 = scalar_lea.hbm %s2, %s194
          %s196 = sshll.u32 %s188, 4
          %s197 = int_to_ptr.vmem [resolvable:$true] %s196
          %202 = dma.hbm_to_vmem [thread:$0]  %s195, 512, %s197, %s185, 128, 128, 8
        $region24: #{tpu_custom_call.1} parent=19 // pred_fallthru
          _
        // Predicated region
        $region25: #{tpu_custom_call.1} parent=19 // pred_check
          %p203 = pneg %p93
        $region26: #{tpu_custom_call.1} parent=19 // pred_check_branch
          %205 = sbr.rel (%p203) target = $region28
        $region27: #{tpu_custom_call.1} parent=19 // pred_region
          %s206 = sand.u32 %s26, 1
          %s207 = scalar_lea.sflag [#allocation8], %s206
          %s208 = sand.u32 %s83, 1
          %s209 = smul.addr %s208, 16
          %s210 = scalar_lea.vmem [#allocation9], %s209
          %s211 = smul.u32 2, %s26
          %s213 = ssub.s32 256, 256
          %214 = vsyncadd %s207, %s213
          %s215 = smul.addr %s211, 128
          %s216 = scalar_lea.hbm %s3, %s215
          %s217 = sshll.u32 %s210, 4
          %s218 = int_to_ptr.vmem [resolvable:$true] %s217
          %223 = dma.hbm_to_vmem [thread:$0]  %s216, 256, %s218, %s207, 128, 128, 8
        $region28: #{tpu_custom_call.1} parent=19 // pred_fallthru
          _
      $region20: #{tpu_custom_call.1} parent=5 // pred_fallthru
        _
      %p224 = scmp.le.s32.totalorder 1, %s26
      %p225 = scmp.lt.s32.totalorder %s26, 3
      %p226 = pnand %p224, %p225
      %p227 = pneg %p226
      // Predicated region
      $region29: #{tpu_custom_call.1} parent=5 // pred_check
        _
      $region30: #{tpu_custom_call.1} parent=5 // pred_check_branch
        %229 = sbr.rel (%p226) target = $region32
      $region31: #{tpu_custom_call.1} parent=5 // pred_region
        %s230 = ssub.s32 %s26, 1
        // Predicated region
        $region33: #{tpu_custom_call.1} parent=31 // pred_check
          %p231 = pneg %p47
        $region34: #{tpu_custom_call.1} parent=31 // pred_check_branch
          %233 = sbr.rel (%p231) target = $region36
        $region35: #{tpu_custom_call.1} parent=31 // pred_region
          %234 = dma.done [#allocation5], 64
        $region36: #{tpu_custom_call.1} parent=31 // pred_fallthru
          _
        %s235 = sand.u32 %s31, 1
        %s236 = scalar_lea.sflag [#allocation8], %s235
        %s237 = sand.u32 %s60, 1
        %s238 = smul.addr %s237, 32
        %s239 = scalar_lea.vmem [#allocation7], %s238
        // Predicated region
        $region37: #{tpu_custom_call.1} parent=31 // pred_check
          %p240 = pneg %p73
        $region38: #{tpu_custom_call.1} parent=31 // pred_check_branch
          %242 = sbr.rel (%p240) target = $region40
        $region39: #{tpu_custom_call.1} parent=31 // pred_region
          %243 = dma.done %s236, 512
        $region40: #{tpu_custom_call.1} parent=31 // pred_fallthru
          _
        %s244 = sand.u32 %s31, 1
        %s245 = scalar_lea.sflag [#allocation8], %s244
        %s246 = sand.u32 %s86, 1
        %s247 = smul.addr %s246, 16
        %s248 = scalar_lea.vmem [#allocation9], %s247
        // Predicated region
        $region41: #{tpu_custom_call.1} parent=31 // pred_check
          %p249 = pneg %p99
        $region42: #{tpu_custom_call.1} parent=31 // pred_check_branch
          %251 = sbr.rel (%p249) target = $region44
        $region43: #{tpu_custom_call.1} parent=31 // pred_region
          %252 = dma.done %s245, 256
        $region44: #{tpu_custom_call.1} parent=31 // pred_fallthru
          _
        %p253 = pneg %p47
        %p254 = pneg %p44
        %s255 = sand.u32 %s31, 1
        %s256 = scalar_lea.sflag [#allocation8], %s255
        %s257 = sand.u32 %s60, 1
        %s258 = smul.addr %s257, 32
        %s259 = scalar_lea.vmem [#allocation7], %s258
        %p260 = pneg %p73
        %p261 = pneg %p70
        %s262 = sand.u32 %s31, 1
        %s263 = scalar_lea.sflag [#allocation8], %s262
        %s264 = sand.u32 %s86, 1
        %s265 = smul.addr %s264, 16
        %s266 = scalar_lea.vmem [#allocation9], %s265
        %p267 = pneg %p99
        %p268 = pneg %p96
        %p269 = pneg %p125
        %p270 = pneg %p122
        %s271 = sand.u32 %s112, 1
        %s272 = scalar_lea.sflag [#allocation6], %s271
        %s273 = sand.u32 %s112, 1
        %s274 = smul.addr %s273, 32
        %s275 = scalar_lea.vmem [#allocation10], %s274
        %p276 = pneg %p151
        %p277 = pneg %p148
        %s278 = sand.u32 %s138, 1
        %s279 = scalar_lea.sflag [#allocation12], %s278
        %s280 = sand.u32 %s138, 1
        %s281 = smul.addr %s280, 32
        %s282 = scalar_lea.vmem [#allocation11], %s281
        %s283 = smul.u32 2, %s31
        %s284 = smul.u32 2, %s31
        %s285 = smul.u32 2, %s31
        %s286 = smul.u32 2, %s31
        %v288 = vld [vmem:[%s239] sm:$0xff]
        %v289 = vld [vmem:[%s239 + $0x8] sm:$0xff]
        %v290 = vld [vmem:[%s239 + $0x10] sm:$0xff]
        %v291 = vld [vmem:[%s239 + $0x18] sm:$0xff]
        %v292 = vld [vmem:[%s248] sm:$0xff]
        %v293 = vld [vmem:[%s248 + $0x8] sm:$0xff]
        %v294 = vpack.c.bf16 %v289, %v288
        %v295 = vpack.c.bf16 %v291, %v290
        %v296 = vpack.c.bf16 %v292, %v292
        %v297 = vpack.c.bf16 %v293, %v293
        %v298 = vld [vmem:[#allocation4] sm:$0x1]
        %v299 = vld [vmem:[#allocation4 + $0x1] sm:$0x1]
        %v300 = vld [vmem:[#allocation4 + $0x2] sm:$0x1]
        %v301 = vld [vmem:[#allocation4 + $0x3] sm:$0x1]
        %v302 = vlaneseq
        %v303 = vshrl.u32 %v302, 7
        %v304 = vsub.s32 0, %v303
        %v305 = vrot.slane %v300, %v304
        %v306 = vmul.f32 %v288, %v305
        %v307 = vmul.f32 %v289, %v305
        %v308 = vmul.f32 %v290, %v305
        %v309 = vmul.f32 %v291, %v305
        %v310 = vlaneseq
        %v311 = vshrl.u32 %v310, 7
        %v312 = vsub.s32 0, %v311
        %v313 = vrot.slane %v299, %v312
        %v314 = vadd.f32 %v306, %v313
        %v315 = vadd.f32 %v307, %v313
        %v316 = vadd.f32 %v308, %v313
        %v317 = vadd.f32 %v309, %v313
        %v318 = vpack.c.bf16 %v315, %v314
        %v319 = vpack.c.bf16 %v317, %v316
        %v320 = vlaneseq
        %v321 = vshrl.u32 %v320, 7
        %v322 = vsub.s32 0, %v321
        %v323 = vrot.slane %v298, %v322
        %v324 = vmul.f32 %v288, %v323
        %v325 = vmul.f32 %v289, %v323
        %v326 = vmul.f32 %v290, %v323
        %v327 = vmul.f32 %v291, %v323
        %vm328 = vcmask 261120
        %v329 = vsel %vm328, %v324, 0.0
        %330 = vadd.xlane.f32.xlu0 %v329
        %v331 = vpop.xlane.xlu0 %330
        %v332 = vsel %vm328, %v325, 0.0
        %333 = vadd.xlane.f32.xlu0 %v332
        %v334 = vpop.xlane.xlu0 %333
        %v335 = vsel %vm328, %v326, 0.0
        %336 = vadd.xlane.f32.xlu0 %v335
        %v337 = vpop.xlane.xlu0 %336
        %v338 = vsel %vm328, %v327, 0.0
        %339 = vadd.xlane.f32.xlu0 %v338
        %v340 = vpop.xlane.xlu0 %339
        %v341 = vlaneseq
        %v342 = vshrl.u32 %v341, 7
        %v343 = vsub.s32 0, %v342
        %v344 = vrot.slane %v301, %v343
        %v345 = vadd.f32 %v331, %v344
        %v346 = vadd.f32 %v334, %v344
        %v347 = vadd.f32 %v337, %v344
        %v348 = vadd.f32 %v340, %v344
        %350 = vset.pattern.permute.xlu0 0
        %351 = vperm.xlu0 %350, %v345
        %v352 = vpop.permute.xlu0 %351
        %355 = vset.pattern.permute.xlu0 0
        %356 = vperm.xlu0 %355, %v346
        %v357 = vpop.permute.xlu0 %356
        %360 = vset.pattern.permute.xlu0 0
        %361 = vperm.xlu0 %360, %v347
        %v362 = vpop.permute.xlu0 %361
        %365 = vset.pattern.permute.xlu0 0
        %366 = vperm.xlu0 %365, %v348
        %v367 = vpop.permute.xlu0 %366
        %v370 = vsel %vm328, %v318, 0
        %v373 = vsel %vm328, %v296, 0
        %375 = vmatprep.subr.bf16.mxu0 0
        %376 = vmatpush1.bf16.xpose.msra.mxu0 %v373
        %377 = vmatprep.subr.bf16.mxu0 0
        %378 = vmatpush1.bf16.xpose.msra.mxu0 0
        %379 = vmatprep.subr.bf16.mxu0 0
        %380 = vmatpush1.bf16.xpose.msra.mxu0 0
        %381 = vmatprep.subr.bf16.mxu0 0
        %382 = vmatpush1.bf16.xpose.msra.mxu0 0
        %383 = vmatprep.subr.bf16.mxu0 0
        %384 = vmatpush1.bf16.xpose.msra.mxu0 0
        %385 = vmatprep.subr.bf16.mxu0 0
        %386 = vmatpush1.bf16.xpose.msra.mxu0 0
        %387 = vmatprep.subr.bf16.mxu0 0
        %388 = vmatpush1.bf16.xpose.msra.mxu0 0
        %389 = vmatprep.subr.bf16.mxu0 0
        %390 = vmatpush1.bf16.xpose.msra.mxu0 0
        %391 = vmatprep.subr.bf16.mxu0 0
        %392 = vmatpush1.bf16.xpose.msra.mxu0 0
        %393 = vmatprep.subr.bf16.mxu0 0
        %394 = vmatpush1.bf16.xpose.msra.mxu0 0
        %395 = vmatprep.subr.bf16.mxu0 0
        %396 = vmatpush1.bf16.xpose.msra.mxu0 0
        %397 = vmatprep.subr.bf16.mxu0 0
        %398 = vmatpush1.bf16.xpose.msra.mxu0 0
        %399 = vmatprep.subr.bf16.mxu0 0
        %400 = vmatpush1.bf16.xpose.msra.mxu0 0
        %401 = vmatprep.subr.bf16.mxu0 0
        %402 = vmatpush1.bf16.xpose.msra.mxu0 0
        %403 = vmatprep.subr.bf16.mxu0 0
        %404 = vmatpush1.bf16.xpose.msra.mxu0 0
        %405 = vmatprep.subr.bf16.mxu0 0
        %406 = vmatpush1.bf16.xpose.msra.mxu0 0
        %407 = vmatprep.mubr.bf16.mxu0 0
        %408 = vmatmul.mubr.bf16.gmra.mrb[0].mxu0 %v370
        %v409 = vpop.f32.mrb[0].mxu0
        %v410 = vadd.f32 %v352, %v409
        %v411 = vpop.f32.mrb[0].mxu0
        %v412 = vpop.f32.mrb[0].mxu0
        %v413 = vadd.f32 %v357, %v412
        %v414 = vpop.f32.mrb[0].mxu0
        %415 = vdwg.mxu0
        %v417 = vsel %vm328, %v319, 0
        %v420 = vsel %vm328, %v297, 0
        %422 = vmatprep.subr.bf16.mxu0 0
        %423 = vmatpush1.bf16.xpose.msra.mxu0 %v420
        %424 = vmatprep.subr.bf16.mxu0 0
        %425 = vmatpush1.bf16.xpose.msra.mxu0 0
        %426 = vmatprep.subr.bf16.mxu0 0
        %427 = vmatpush1.bf16.xpose.msra.mxu0 0
        %428 = vmatprep.subr.bf16.mxu0 0
        %429 = vmatpush1.bf16.xpose.msra.mxu0 0
        %430 = vmatprep.subr.bf16.mxu0 0
        %431 = vmatpush1.bf16.xpose.msra.mxu0 0
        %432 = vmatprep.subr.bf16.mxu0 0
        %433 = vmatpush1.bf16.xpose.msra.mxu0 0
        %434 = vmatprep.subr.bf16.mxu0 0
        %435 = vmatpush1.bf16.xpose.msra.mxu0 0
        %436 = vmatprep.subr.bf16.mxu0 0
        %437 = vmatpush1.bf16.xpose.msra.mxu0 0
        %438 = vmatprep.subr.bf16.mxu0 0
        %439 = vmatpush1.bf16.xpose.msra.mxu0 0
        %440 = vmatprep.subr.bf16.mxu0 0
        %441 = vmatpush1.bf16.xpose.msra.mxu0 0
        %442 = vmatprep.subr.bf16.mxu0 0
        %443 = vmatpush1.bf16.xpose.msra.mxu0 0
        %444 = vmatprep.subr.bf16.mxu0 0
        %445 = vmatpush1.bf16.xpose.msra.mxu0 0
        %446 = vmatprep.subr.bf16.mxu0 0
        %447 = vmatpush1.bf16.xpose.msra.mxu0 0
        %448 = vmatprep.subr.bf16.mxu0 0
        %449 = vmatpush1.bf16.xpose.msra.mxu0 0
        %450 = vmatprep.subr.bf16.mxu0 0
        %451 = vmatpush1.bf16.xpose.msra.mxu0 0
        %452 = vmatprep.subr.bf16.mxu0 0
        %453 = vmatpush1.bf16.xpose.msra.mxu0 0
        %454 = vmatprep.mubr.bf16.mxu0 0
        %455 = vmatmul.mubr.bf16.gmra.mrb[0].mxu0 %v417
        %v456 = vpop.f32.mrb[0].mxu0
        %v457 = vadd.f32 %v362, %v456
        %v458 = vpop.f32.mrb[0].mxu0
        %v459 = vpop.f32.mrb[0].mxu0
        %v460 = vadd.f32 %v367, %v459
        %v461 = vpop.f32.mrb[0].mxu0
        %462 = vdwg.mxu0
        %s463 = smul.u32 %s31, 2
        %v464 = vlaneseq
        %v465 = vshrl.u32 %v464, 7
        %v466 = vadd.s32 %v465, 8
        %v467 = vlaneseq
        %v468 = vand.u32 %v467, 127
        %s469 = smul.u32 %s31, 4
        %s470 = sld [smem:[#allocation3 + %s469]]
        %s471 = sadd.s32 %s469, 1
        %s472 = sld [smem:[#allocation3 + %s471]]
        %v473 = vstv %s470
        %vm474 = vcmp.lt.s32.totalorder %v465, %v473
        %vm475 = vcmp.lt.s32.totalorder %v466, %v473
        %v476 = vsel %vm474, 1, 0
        %v477 = vsel %vm475, 1, 0
        %v478 = vcvt.s32.f32 %v476
        %v479 = vcvt.s32.f32 %v477
        %v480 = vstv %s472
        %vm481 = vcmp.lt.s32.totalorder %v468, %v480
        %v482 = vsel %vm481, 1, 0
        %v483 = vcvt.s32.f32 %v482
        %s484 = sadd.s32 %s463, 1
        %s485 = smul.u32 %s484, 2
        %s486 = sld [smem:[#allocation3 + %s485]]
        %s487 = sadd.s32 %s485, 1
        %s488 = sld [smem:[#allocation3 + %s487]]
        %v489 = vstv %s486
        %vm490 = vcmp.lt.s32.totalorder %v465, %v489
        %vm491 = vcmp.lt.s32.totalorder %v466, %v489
        %v492 = vsel %vm490, 1, 0
        %v493 = vsel %vm491, 1, 0
        %v494 = vcvt.s32.f32 %v492
        %v495 = vcvt.s32.f32 %v493
        %v496 = vstv %s488
        %vm497 = vcmp.lt.s32.totalorder %v468, %v496
        %v498 = vsel %vm497, 1, 0
        %v499 = vcvt.s32.f32 %v498
        %vm500 = vcmp.gt.f32.partialorder %v483, 0.5
        %vm501 = vcmp.gt.f32.partialorder %v499, 0.5
        %v502 = vsel %vm500, 1, 0
        %v503 = vsel %vm501, 1, 0
        %v504 = vlaneseq
        %v505 = vshrl.u32 %v504, 7
        %v506 = vsub.s32 0, %v505
        %v507 = vrot.slane %v502, %v506
        %v508 = vlaneseq
        %v509 = vshrl.u32 %v508, 7
        %v510 = vsub.s32 0, %v509
        %v511 = vrot.slane %v503, %v510
        %vm512 = vcmp.eq.s32.totalorder %v507, 1
        %vm513 = vcmp.eq.s32.totalorder %v511, 1
        %v514 = vsel %vm512, %v410, -10000000.0
        %v515 = vsel %vm512, %v413, -10000000.0
        %v516 = vsel %vm513, %v457, -10000000.0
        %v517 = vsel %vm513, %v460, -10000000.0
        %vm518 = vcmp.gt.f32.partialorder %v478, 0.5
        %vm519 = vcmp.gt.f32.partialorder %v479, 0.5
        %vm520 = vcmp.gt.f32.partialorder %v494, 0.5
        %vm521 = vcmp.gt.f32.partialorder %v495, 0.5
        %v522 = vsel %vm518, 1, 0
        %v523 = vsel %vm519, 1, 0
        %v524 = vsel %vm520, 1, 0
        %v525 = vsel %vm521, 1, 0
        %526 = vset.pattern.permute.xlu0 0
        %527 = vperm.xlu0 %526, %v522
        %v528 = vpop.permute.xlu0 %527
        %529 = vset.pattern.permute.xlu0 0
        %530 = vperm.xlu0 %529, %v523
        %v531 = vpop.permute.xlu0 %530
        %532 = vset.pattern.permute.xlu0 0
        %533 = vperm.xlu0 %532, %v524
        %v534 = vpop.permute.xlu0 %533
        %535 = vset.pattern.permute.xlu0 0
        %536 = vperm.xlu0 %535, %v525
        %v537 = vpop.permute.xlu0 %536
        %vm538 = vcmp.eq.s32.totalorder %v528, 1
        %vm539 = vcmp.eq.s32.totalorder %v531, 1
        %vm540 = vcmp.eq.s32.totalorder %v534, 1
        %vm541 = vcmp.eq.s32.totalorder %v537, 1
        %v542 = vsel %vm538, %v514, -10000000.0
        %v543 = vsel %vm539, %v515, -10000000.0
        %v544 = vsel %vm540, %v516, -10000000.0
        %v545 = vsel %vm541, %v517, -10000000.0
        %vm546 = vcmask 64512
        %v547 = vsel %vm546, %v542, -inf
        %548 = vmax.xlane.f32.xlu0 %v547
        %v549 = vpop.xlane.xlu0 %548
        %v550 = vsel %vm546, %v543, -inf
        %551 = vmax.xlane.f32.xlu0 %v550
        %v552 = vpop.xlane.xlu0 %551
        %v553 = vsel %vm546, %v544, -inf
        %554 = vmax.xlane.f32.xlu0 %v553
        %v555 = vpop.xlane.xlu0 %554
        %v556 = vsel %vm546, %v545, -inf
        %557 = vmax.xlane.f32.xlu0 %v556
        %v558 = vpop.xlane.xlu0 %557
        %v559 = vmax.f32 %v549, %v552
        %v560 = vrot.slane %v559, 4
        %v561 = vmax.f32 %v559, %v560
        %v562 = vrot.slane %v561, 2
        %v563 = vmax.f32 %v561, %v562
        %v564 = vrot.slane %v563, 1
        %v565 = vmax.f32 %v563, %v564
        %v566 = vmax.f32 %v555, %v558
        %v567 = vrot.slane %v566, 4
        %v568 = vmax.f32 %v566, %v567
        %v569 = vrot.slane %v568, 2
        %v570 = vmax.f32 %v568, %v569
        %v571 = vrot.slane %v570, 1
        %v572 = vmax.f32 %v570, %v571
        %v573 = vmax.f32 %v565, -30.0
        %v574 = vmax.f32 %v572, -30.0
        %v575 = vsub.f32 %v542, %v573
        %v576 = vsub.f32 %v543, %v573
        %v577 = vsub.f32 %v544, %v574
        %v578 = vsub.f32 %v545, %v574
        %v579 = vmul.f32 %v575, 1.442695
        %v580 = vpow.pop %v579
        %v581 = vmul.f32 %v576, 1.442695
        %v582 = vpow.pop %v581
        %v583 = vmul.f32 %v577, 1.442695
        %v584 = vpow.pop %v583
        %v585 = vmul.f32 %v578, 1.442695
        %v586 = vpow.pop %v585
        %v587 = vsel %vm546, %v580, 0.0
        %588 = vadd.xlane.f32.xlu0 %v587
        %v589 = vpop.xlane.xlu0 %588
        %v590 = vsel %vm546, %v582, 0.0
        %591 = vadd.xlane.f32.xlu0 %v590
        %v592 = vpop.xlane.xlu0 %591
        %v593 = vsel %vm546, %v584, 0.0
        %594 = vadd.xlane.f32.xlu0 %v593
        %v595 = vpop.xlane.xlu0 %594
        %v596 = vsel %vm546, %v586, 0.0
        %597 = vadd.xlane.f32.xlu0 %v596
        %v598 = vpop.xlane.xlu0 %597
        %v599 = vadd.f32 %v587, %v590
        %v600 = vrot.slane %v599, 4
        %v601 = vadd.f32 %v599, %v600
        %v602 = vrot.slane %v601, 2
        %v603 = vadd.f32 %v601, %v602
        %v604 = vrot.slane %v603, 1
        %v605 = vadd.f32 %v603, %v604
        %v606 = vadd.f32 %v593, %v596
        %v607 = vrot.slane %v606, 4
        %v608 = vadd.f32 %v606, %v607
        %v609 = vrot.slane %v608, 2
        %v610 = vadd.f32 %v608, %v609
        %v611 = vrot.slane %v610, 1
        %v612 = vadd.f32 %v610, %v611
        %vm613 = vcmp.gt.f32.partialorder %v589, 0.0
        %vm614 = vcmp.gt.f32.partialorder %v592, 0.0
        %vm615 = vcmp.gt.f32.partialorder %v595, 0.0
        %vm616 = vcmp.gt.f32.partialorder %v598, 0.0
        %v617 = vsel %vm613, %v589, 1.0
        %v618 = vsel %vm614, %v592, 1.0
        %v619 = vsel %vm615, %v595, 1.0
        %v620 = vsel %vm616, %v598, 1.0
        %v621 = vrcp.pop %v617
        %v622 = vrcp.pop %v618
        %v623 = vrcp.pop %v619
        %v624 = vrcp.pop %v620
        %vm625 = vcmp.gt.f32.partialorder %v605, 0.0
        %vm626 = vcmp.gt.f32.partialorder %v612, 0.0
        %v627 = vsel %vm625, %v605, 1.0
        %v628 = vsel %vm626, %v612, 1.0
        %v629 = vrcp.pop %v627
        %v630 = vrcp.pop %v628
        %v631 = vmul.f32 %v580, %v621
        %v632 = vmul.f32 %v582, %v622
        %v633 = vmul.f32 %v584, %v623
        %v634 = vmul.f32 %v586, %v624
        %v635 = vpack.c.bf16 %v632, %v631
        %v636 = vpack.c.bf16 %v634, %v633
        %v637 = vmul.f32 %v580, %v629
        %v638 = vmul.f32 %v582, %v629
        %v639 = vmul.f32 %v584, %v630
        %v640 = vmul.f32 %v586, %v630
        %v641 = vpack.c.bf16 %v638, %v637
        %v642 = vpack.c.bf16 %v640, %v639
        %v644 = vsel %vm546, %v635, 0
        %vm646 = vcmask 1043456
        %v647 = vsel %vm646, %v296, 0
        %649 = vmatprep.subr.bf16.mxu0 0
        %650 = vmatpush1.bf16.msra.mxu0 %v647
        %651 = vmatprep.subr.bf16.mxu0 0
        %652 = vmatpush1.bf16.msra.mxu0 0
        %653 = vmatprep.subr.bf16.mxu0 0
        %654 = vmatpush1.bf16.msra.mxu0 0
        %655 = vmatprep.subr.bf16.mxu0 0
        %656 = vmatpush1.bf16.msra.mxu0 0
        %657 = vmatprep.subr.bf16.mxu0 0
        %658 = vmatpush1.bf16.msra.mxu0 0
        %659 = vmatprep.subr.bf16.mxu0 0
        %660 = vmatpush1.bf16.msra.mxu0 0
        %661 = vmatprep.subr.bf16.mxu0 0
        %662 = vmatpush1.bf16.msra.mxu0 0
        %663 = vmatprep.subr.bf16.mxu0 0
        %664 = vmatpush1.bf16.msra.mxu0 0
        %665 = vmatprep.subr.bf16.mxu0 0
        %666 = vmatpush1.bf16.msra.mxu0 0
        %667 = vmatprep.subr.bf16.mxu0 0
        %668 = vmatpush1.bf16.msra.mxu0 0
        %669 = vmatprep.subr.bf16.mxu0 0
        %670 = vmatpush1.bf16.msra.mxu0 0
        %671 = vmatprep.subr.bf16.mxu0 0
        %672 = vmatpush1.bf16.msra.mxu0 0
        %673 = vmatprep.subr.bf16.mxu0 0
        %674 = vmatpush1.bf16.msra.mxu0 0
        %675 = vmatprep.subr.bf16.mxu0 0
        %676 = vmatpush1.bf16.msra.mxu0 0
        %677 = vmatprep.subr.bf16.mxu0 0
        %678 = vmatpush1.bf16.msra.mxu0 0
        %679 = vmatprep.subr.bf16.mxu0 0
        %680 = vmatpush1.bf16.msra.mxu0 0
        %681 = vmatprep.mubr.bf16.mxu0 0
        %682 = vmatmul.mubr.bf16.gmra.mrb[0].mxu0 %v644
        %v683 = vpop.f32.mrb[0].mxu0
        %v684 = vadd.f32 0.0, %v683
        %v685 = vpop.f32.mrb[0].mxu0
        %v686 = vpop.f32.mrb[0].mxu0
        %v687 = vadd.f32 0.0, %v686
        %v688 = vpop.f32.mrb[0].mxu0
        %689 = vdwg.mxu0
        %v691 = vsel %vm546, %v636, 0
        %v693 = vsel %vm646, %v297, 0
        %695 = vmatprep.subr.bf16.mxu0 0
        %696 = vmatpush1.bf16.msra.mxu0 %v693
        %697 = vmatprep.subr.bf16.mxu0 0
        %698 = vmatpush1.bf16.msra.mxu0 0
        %699 = vmatprep.subr.bf16.mxu0 0
        %700 = vmatpush1.bf16.msra.mxu0 0
        %701 = vmatprep.subr.bf16.mxu0 0
        %702 = vmatpush1.bf16.msra.mxu0 0
        %703 = vmatprep.subr.bf16.mxu0 0
        %704 = vmatpush1.bf16.msra.mxu0 0
        %705 = vmatprep.subr.bf16.mxu0 0
        %706 = vmatpush1.bf16.msra.mxu0 0
        %707 = vmatprep.subr.bf16.mxu0 0
        %708 = vmatpush1.bf16.msra.mxu0 0
        %709 = vmatprep.subr.bf16.mxu0 0
        %710 = vmatpush1.bf16.msra.mxu0 0
        %711 = vmatprep.subr.bf16.mxu0 0
        %712 = vmatpush1.bf16.msra.mxu0 0
        %713 = vmatprep.subr.bf16.mxu0 0
        %714 = vmatpush1.bf16.msra.mxu0 0
        %715 = vmatprep.subr.bf16.mxu0 0
        %716 = vmatpush1.bf16.msra.mxu0 0
        %717 = vmatprep.subr.bf16.mxu0 0
        %718 = vmatpush1.bf16.msra.mxu0 0
        %719 = vmatprep.subr.bf16.mxu0 0
        %720 = vmatpush1.bf16.msra.mxu0 0
        %721 = vmatprep.subr.bf16.mxu0 0
        %722 = vmatpush1.bf16.msra.mxu0 0
        %723 = vmatprep.subr.bf16.mxu0 0
        %724 = vmatpush1.bf16.msra.mxu0 0
        %725 = vmatprep.subr.bf16.mxu0 0
        %726 = vmatpush1.bf16.msra.mxu0 0
        %727 = vmatprep.mubr.bf16.mxu0 0
        %728 = vmatmul.mubr.bf16.gmra.mrb[0].mxu0 %v691
        %v729 = vpop.f32.mrb[0].mxu0
        %v730 = vadd.f32 0.0, %v729
        %v731 = vpop.f32.mrb[0].mxu0
        %v732 = vpop.f32.mrb[0].mxu0
        %v733 = vadd.f32 0.0, %v732
        %v734 = vpop.f32.mrb[0].mxu0
        %735 = vdwg.mxu0
        %736 = vxpose.xlu0.c.b16.start [1/8] %v641, 128
        %737 = vxpose.xlu0.c.b16.cont [2/8] 0, 128
        %738 = vxpose.xlu0.c.b16.cont [3/8] 0, 128
        %739 = vxpose.xlu0.c.b16.cont [4/8] 0, 128
        %740 = vxpose.xlu0.c.b16.cont [5/8] 0, 128
        %741 = vxpose.xlu0.c.b16.cont [6/8] 0, 128
        %742 = vxpose.xlu0.c.b16.cont [7/8] 0, 128
        %743 = vxpose.xlu0.c.b16.end [8/8] 0, 128
        %v744 = vpop.trf.xlu0
        %v745 = vpop.trf.xlu0
        %v746 = vpop.trf.xlu0
        %v747 = vpop.trf.xlu0
        %v748 = vpop.trf.xlu0
        %v749 = vpop.trf.xlu0
        %v750 = vpop.trf.xlu0
        %v751 = vpop.trf.xlu0
        %vm752 = vcmask 130048
        %v754 = vsel %vm752, %v744, 0
        %756 = vmatprep.subr.bf16.mxu0 0
        %757 = vmatpush1.bf16.msra.mxu0 %v294
        %758 = vmatprep.subr.bf16.mxu0 0
        %759 = vmatpush1.bf16.msra.mxu0 0
        %760 = vmatprep.subr.bf16.mxu0 0
        %761 = vmatpush1.bf16.msra.mxu0 0
        %762 = vmatprep.subr.bf16.mxu0 0
        %763 = vmatpush1.bf16.msra.mxu0 0
        %764 = vmatprep.subr.bf16.mxu0 0
        %765 = vmatpush1.bf16.msra.mxu0 0
        %766 = vmatprep.subr.bf16.mxu0 0
        %767 = vmatpush1.bf16.msra.mxu0 0
        %768 = vmatprep.subr.bf16.mxu0 0
        %769 = vmatpush1.bf16.msra.mxu0 0
        %770 = vmatprep.subr.bf16.mxu0 0
        %771 = vmatpush1.bf16.msra.mxu0 0
        %772 = vmatprep.subr.bf16.mxu0 0
        %773 = vmatpush1.bf16.msra.mxu0 0
        %774 = vmatprep.subr.bf16.mxu0 0
        %775 = vmatpush1.bf16.msra.mxu0 0
        %776 = vmatprep.subr.bf16.mxu0 0
        %777 = vmatpush1.bf16.msra.mxu0 0
        %778 = vmatprep.subr.bf16.mxu0 0
        %779 = vmatpush1.bf16.msra.mxu0 0
        %780 = vmatprep.subr.bf16.mxu0 0
        %781 = vmatpush1.bf16.msra.mxu0 0
        %782 = vmatprep.subr.bf16.mxu0 0
        %783 = vmatpush1.bf16.msra.mxu0 0
        %784 = vmatprep.subr.bf16.mxu0 0
        %785 = vmatpush1.bf16.msra.mxu0 0
        %786 = vmatprep.subr.bf16.mxu0 0
        %787 = vmatpush1.bf16.msra.mxu0 0
        %788 = vmatprep.mubr.bf16.mxu0 0
        %789 = vmatmul.mubr.bf16.gmra.mrb[0].mxu0 %v754
        %v790 = vpop.f32.mrb[0].mxu0
        %v791 = vadd.f32 0.0, %v790
        %v792 = vpop.f32.mrb[0].mxu0
        %v793 = vpop.f32.mrb[0].mxu0
        %v794 = vpop.f32.mrb[0].mxu0
        %795 = vdwg.mxu0
        %796 = vxpose.xlu0.c.b16.start [1/8] %v642, 128
        %797 = vxpose.xlu0.c.b16.cont [2/8] 0, 128
        %798 = vxpose.xlu0.c.b16.cont [3/8] 0, 128
        %799 = vxpose.xlu0.c.b16.cont [4/8] 0, 128
        %800 = vxpose.xlu0.c.b16.cont [5/8] 0, 128
        %801 = vxpose.xlu0.c.b16.cont [6/8] 0, 128
        %802 = vxpose.xlu0.c.b16.cont [7/8] 0, 128
        %803 = vxpose.xlu0.c.b16.end [8/8] 0, 128
        %v804 = vpop.trf.xlu0
        %v805 = vpop.trf.xlu0
        %v806 = vpop.trf.xlu0
        %v807 = vpop.trf.xlu0
        %v808 = vpop.trf.xlu0
        %v809 = vpop.trf.xlu0
        %v810 = vpop.trf.xlu0
        %v811 = vpop.trf.xlu0
        %v813 = vsel %vm752, %v804, 0
        %815 = vmatprep.subr.bf16.mxu0 0
        %816 = vmatpush1.bf16.msra.mxu0 %v295
        %817 = vmatprep.subr.bf16.mxu0 0
        %818 = vmatpush1.bf16.msra.mxu0 0
        %819 = vmatprep.subr.bf16.mxu0 0
        %820 = vmatpush1.bf16.msra.mxu0 0
        %821 = vmatprep.subr.bf16.mxu0 0
        %822 = vmatpush1.bf16.msra.mxu0 0
        %823 = vmatprep.subr.bf16.mxu0 0
        %824 = vmatpush1.bf16.msra.mxu0 0
        %825 = vmatprep.subr.bf16.mxu0 0
        %826 = vmatpush1.bf16.msra.mxu0 0
        %827 = vmatprep.subr.bf16.mxu0 0
        %828 = vmatpush1.bf16.msra.mxu0 0
        %829 = vmatprep.subr.bf16.mxu0 0
        %830 = vmatpush1.bf16.msra.mxu0 0
        %831 = vmatprep.subr.bf16.mxu0 0
        %832 = vmatpush1.bf16.msra.mxu0 0
        %833 = vmatprep.subr.bf16.mxu0 0
        %834 = vmatpush1.bf16.msra.mxu0 0
        %835 = vmatprep.subr.bf16.mxu0 0
        %836 = vmatpush1.bf16.msra.mxu0 0
        %837 = vmatprep.subr.bf16.mxu0 0
        %838 = vmatpush1.bf16.msra.mxu0 0
        %839 = vmatprep.subr.bf16.mxu0 0
        %840 = vmatpush1.bf16.msra.mxu0 0
        %841 = vmatprep.subr.bf16.mxu0 0
        %842 = vmatpush1.bf16.msra.mxu0 0
        %843 = vmatprep.subr.bf16.mxu0 0
        %844 = vmatpush1.bf16.msra.mxu0 0
        %845 = vmatprep.subr.bf16.mxu0 0
        %846 = vmatpush1.bf16.msra.mxu0 0
        %847 = vmatprep.mubr.bf16.mxu0 0
        %848 = vmatmul.mubr.bf16.gmra.mrb[0].mxu0 %v813
        %v849 = vpop.f32.mrb[0].mxu0
        %v850 = vadd.f32 0.0, %v849
        %v851 = vpop.f32.mrb[0].mxu0
        %v852 = vpop.f32.mrb[0].mxu0
        %v853 = vpop.f32.mrb[0].mxu0
        %854 = vdwg.mxu0
        %v855 = vpack.c.bf16 %v791, %v791
        %v856 = vpack.c.bf16 %v850, %v850
        %v858 = vsel %vm646, %v855, 0
        %860 = vmatprep.subr.bf16.mxu0 0
        %861 = vmatpush1.bf16.msra.mxu0 %v858
        %862 = vmatprep.subr.bf16.mxu0 0
        %863 = vmatpush1.bf16.msra.mxu0 0
        %864 = vmatprep.subr.bf16.mxu0 0
        %865 = vmatpush1.bf16.msra.mxu0 0
        %866 = vmatprep.subr.bf16.mxu0 0
        %867 = vmatpush1.bf16.msra.mxu0 0
        %868 = vmatprep.subr.bf16.mxu0 0
        %869 = vmatpush1.bf16.msra.mxu0 0
        %870 = vmatprep.subr.bf16.mxu0 0
        %871 = vmatpush1.bf16.msra.mxu0 0
        %872 = vmatprep.subr.bf16.mxu0 0
        %873 = vmatpush1.bf16.msra.mxu0 0
        %874 = vmatprep.subr.bf16.mxu0 0
        %875 = vmatpush1.bf16.msra.mxu0 0
        %876 = vmatprep.subr.bf16.mxu0 0
        %877 = vmatpush1.bf16.msra.mxu0 0
        %878 = vmatprep.subr.bf16.mxu0 0
        %879 = vmatpush1.bf16.msra.mxu0 0
        %880 = vmatprep.subr.bf16.mxu0 0
        %881 = vmatpush1.bf16.msra.mxu0 0
        %882 = vmatprep.subr.bf16.mxu0 0
        %883 = vmatpush1.bf16.msra.mxu0 0
        %884 = vmatprep.subr.bf16.mxu0 0
        %885 = vmatpush1.bf16.msra.mxu0 0
        %886 = vmatprep.subr.bf16.mxu0 0
        %887 = vmatpush1.bf16.msra.mxu0 0
        %888 = vmatprep.subr.bf16.mxu0 0
        %889 = vmatpush1.bf16.msra.mxu0 0
        %890 = vmatprep.subr.bf16.mxu0 0
        %891 = vmatpush1.bf16.msra.mxu0 0
        %892 = vmatprep.mubr.bf16.mxu0 0
        %893 = vmatmul.mubr.bf16.gmra.mrb[0].mxu0 %v644
        %v894 = vpop.f32.mrb[0].mxu0
        %v895 = vadd.f32 0.0, %v894
        %v896 = vpop.f32.mrb[0].mxu0
        %v897 = vpop.f32.mrb[0].mxu0
        %v898 = vadd.f32 0.0, %v897
        %v899 = vpop.f32.mrb[0].mxu0
        %900 = vdwg.mxu0
        %v902 = vsel %vm646, %v856, 0
        %904 = vmatprep.subr.bf16.mxu0 0
        %905 = vmatpush1.bf16.msra.mxu0 %v902
        %906 = vmatprep.subr.bf16.mxu0 0
        %907 = vmatpush1.bf16.msra.mxu0 0
        %908 = vmatprep.subr.bf16.mxu0 0
        %909 = vmatpush1.bf16.msra.mxu0 0
        %910 = vmatprep.subr.bf16.mxu0 0
        %911 = vmatpush1.bf16.msra.mxu0 0
        %912 = vmatprep.subr.bf16.mxu0 0
        %913 = vmatpush1.bf16.msra.mxu0 0
        %914 = vmatprep.subr.bf16.mxu0 0
        %915 = vmatpush1.bf16.msra.mxu0 0
        %916 = vmatprep.subr.bf16.mxu0 0
        %917 = vmatpush1.bf16.msra.mxu0 0
        %918 = vmatprep.subr.bf16.mxu0 0
        %919 = vmatpush1.bf16.msra.mxu0 0
        %920 = vmatprep.subr.bf16.mxu0 0
        %921 = vmatpush1.bf16.msra.mxu0 0
        %922 = vmatprep.subr.bf16.mxu0 0
        %923 = vmatpush1.bf16.msra.mxu0 0
        %924 = vmatprep.subr.bf16.mxu0 0
        %925 = vmatpush1.bf16.msra.mxu0 0
        %926 = vmatprep.subr.bf16.mxu0 0
        %927 = vmatpush1.bf16.msra.mxu0 0
        %928 = vmatprep.subr.bf16.mxu0 0
        %929 = vmatpush1.bf16.msra.mxu0 0
        %930 = vmatprep.subr.bf16.mxu0 0
        %931 = vmatpush1.bf16.msra.mxu0 0
        %932 = vmatprep.subr.bf16.mxu0 0
        %933 = vmatpush1.bf16.msra.mxu0 0
        %934 = vmatprep.subr.bf16.mxu0 0
        %935 = vmatpush1.bf16.msra.mxu0 0
        %936 = vmatprep.mubr.bf16.mxu0 0
        %937 = vmatmul.mubr.bf16.gmra.mrb[0].mxu0 %v691
        %v938 = vpop.f32.mrb[0].mxu0
        %v939 = vadd.f32 0.0, %v938
        %v940 = vpop.f32.mrb[0].mxu0
        %v941 = vpop.f32.mrb[0].mxu0
        %v942 = vadd.f32 0.0, %v941
        %v943 = vpop.f32.mrb[0].mxu0
        %944 = vdwg.mxu0
        %945 = vst.msk [vmem:[%s275] sm:$0xff] %vm328, %v684
        %946 = vst.msk [vmem:[%s275 + $0x8] sm:$0xff] %vm328, %v687
        %947 = vst.msk [vmem:[%s275 + $0x10] sm:$0xff] %vm328, %v730
        %948 = vst.msk [vmem:[%s275 + $0x18] sm:$0xff] %vm328, %v733
        %949 = vst.msk [vmem:[%s282] sm:$0xff] %vm328, %v895
        %950 = vst.msk [vmem:[%s282 + $0x8] sm:$0xff] %vm328, %v898
        %951 = vst.msk [vmem:[%s282 + $0x10] sm:$0xff] %vm328, %v939
        %952 = vst.msk [vmem:[%s282 + $0x18] sm:$0xff] %vm328, %v942
        %s953 = sand.u32 %s112, 1
        %s954 = scalar_lea.sflag [#allocation6], %s953
        %s955 = sand.u32 %s112, 1
        %s956 = smul.addr %s955, 32
        %s957 = scalar_lea.vmem [#allocation10], %s956
        %s958 = sand.u32 %s138, 1
        %s959 = scalar_lea.sflag [#allocation12], %s958
        %s960 = sand.u32 %s138, 1
        %s961 = smul.addr %s960, 32
        %s962 = scalar_lea.vmem [#allocation11], %s961
        // Predicated region
        $region45: #{tpu_custom_call.1} parent=31 // pred_check
          %p963 = pneg %p122
        $region46: #{tpu_custom_call.1} parent=31 // pred_check_branch
          %965 = sbr.rel (%p963) target = $region48
        $region47: #{tpu_custom_call.1} parent=31 // pred_region
          %s966 = smul.u32 2, %s31
          %s968 = ssub.s32 512, 512
          %969 = vsyncadd %s954, %s968
          %s970 = smul.addr %s966, 2
          %s971 = smul.addr %s970, 128
          %s972 = scalar_lea.hbm %s4, %s971
          %s973 = sshll.u32 %s957, 4
          %s974 = int_to_ptr.vmem [resolvable:$true] %s973
          %979 = dma.vmem_to_hbm [thread:$0]  %s974, 512, %s972, %s954, 128, 128, 8
        $region48: #{tpu_custom_call.1} parent=31 // pred_fallthru
          _
        // Predicated region
        $region49: #{tpu_custom_call.1} parent=31 // pred_check
          %p980 = pneg %p148
        $region50: #{tpu_custom_call.1} parent=31 // pred_check_branch
          %982 = sbr.rel (%p980) target = $region52
        $region51: #{tpu_custom_call.1} parent=31 // pred_region
          %s983 = smul.u32 2, %s31
          %s985 = ssub.s32 512, 512
          %986 = vsyncadd %s959, %s985
          %s987 = smul.addr %s983, 2
          %s988 = smul.addr %s987, 128
          %s989 = scalar_lea.hbm %s5, %s988
          %s990 = sshll.u32 %s962, 4
          %s991 = int_to_ptr.vmem [resolvable:$true] %s990
          %996 = dma.vmem_to_hbm [thread:$0]  %s991, 512, %s989, %s959, 128, 128, 8
        $region52: #{tpu_custom_call.1} parent=31 // pred_fallthru
          _
      $region32: #{tpu_custom_call.1} parent=5 // pred_fallthru
        _
      %p997 = scmp.le.s32.totalorder 2, %s26
      // Predicated region
      $region53: #{tpu_custom_call.1} parent=5 // pred_check
        %p998 = pneg %p997
      $region54: #{tpu_custom_call.1} parent=5 // pred_check_branch
        %1000 = sbr.rel (%p998) target = $region56
      $region55: #{tpu_custom_call.1} parent=5 // pred_region
        %s1001 = ssub.s32 %s26, 2
        // Predicated region
        $region57: #{tpu_custom_call.1} parent=55 // pred_check
          %p1002 = pneg %p128
        $region58: #{tpu_custom_call.1} parent=55 // pred_check_branch
          %1004 = sbr.rel (%p1002) target = $region60
        $region59: #{tpu_custom_call.1} parent=55 // pred_region
          %s1005 = sand.u32 %s113, 1
          %s1006 = scalar_lea.sflag [#allocation6], %s1005
          %s1007 = sand.u32 %s113, 1
          %s1008 = smul.addr %s1007, 32
          %s1009 = scalar_lea.vmem [#allocation10], %s1008
          %1010 = dma.done %s1006, 512
        $region60: #{tpu_custom_call.1} parent=55 // pred_fallthru
          _
        // Predicated region
        $region61: #{tpu_custom_call.1} parent=55 // pred_check
          %p1011 = pneg %p154
        $region62: #{tpu_custom_call.1} parent=55 // pred_check_branch
          %1013 = sbr.rel (%p1011) target = $region64
        $region63: #{tpu_custom_call.1} parent=55 // pred_region
          %s1014 = sand.u32 %s139, 1
          %s1015 = scalar_lea.sflag [#allocation12], %s1014
          %s1016 = sand.u32 %s139, 1
          %s1017 = smul.addr %s1016, 32
          %s1018 = scalar_lea.vmem [#allocation11], %s1017
          %1019 = dma.done %s1015, 512
        $region64: #{tpu_custom_call.1} parent=55 // pred_fallthru
          _
      $region56: #{tpu_custom_call.1} parent=5 // pred_fallthru
        _
    $region6: #{tpu_custom_call.1} parent=1 // loop_footer
      %s30 = sadd.s32 1, %s26
    $region7: #{tpu_custom_call.1} parent=1 // loop_footer_branch
      %25 = sbr.rel target = $region3
    $region8: #{tpu_custom_call.1} parent=1 // loop_exit
      _
    %1020 = vsyncpa [#allocation5], 1
    %s1021 = scalar_lea.sflag [#allocation5], 1
    %1022 = vsyncpa %s1021, 1
    %1023 = vsyncpa [#allocation8], 1
    %s1024 = scalar_lea.sflag [#allocation8], 1
    %1025 = vsyncpa %s1024, 1
    %1026 = vsyncpa [#allocation6], 1
    %s1027 = scalar_lea.sflag [#allocation6], 1
    %1028 = vsyncpa %s1027, 1
    %1029 = vsyncpa [#allocation12], 1
    %s1030 = scalar_lea.sflag [#allocation12], 1
    %1031 = vsyncpa %s1030, 1

</llo_original>
